<compile_context>
chip_gen: v6e
topology: v6e:2x2x1
jax: 0.10.0
libtpu: 0.0.40
codegen_flags: <defaults>
</compile_context>

<pallas_src>
import jax
import jax.numpy as jnp
from jax.experimental import pallas as pl
from jax.experimental.pallas import tpu as pltpu


def _detection_head_kernel(
    hs_ref,     # (Bblk, P, H)       vision features for this batch block
    q_ref,      # (Q, H)             query embeddings (shared across batch)
    wf_ref,     # (H, H + C1)        fused [bbox_l1 | class] weight (in, out)
    bf_ref,     # (1, H + C1)        fused [bbox_l1 | class] bias
    w2_ref,     # (H, 4)             bbox layer-2 weight (in, out)
    b2_ref,     # (1, 4)             bbox layer-2 bias
    out_ref,    # (Bblk, Q, OUT_PAD) packed [cls | box | attn | zero-pad] slab
):
    bb, P, H = hs_ref.shape
    Q = q_ref.shape[0]
    C1 = wf_ref.shape[1] - H
    out_pad = out_ref.shape[-1]

    hs = hs_ref[...]                                            # (bb, P, H)
    q = jnp.broadcast_to(q_ref[...], (bb, Q, H))                # (bb, Q, H)

    # attention scores = queries @ hs^T  -> (bb, Q, P)
    # (one of the two hs matmuls necessarily consumes hs transposed; it is the
    #  smaller of the two at real P/H, so we accept the XLU transpose here)
    scores = jnp.einsum("bqh,bph->bqp", q, hs,
                        preferred_element_type=jnp.float32)

    # numerically-stable softmax over the patch dimension (kept in f32)
    m = jnp.max(scores, axis=-1, keepdims=True)
    e = jnp.exp(scores - m)
    denom = jnp.sum(e, axis=-1, keepdims=True)
    attn = e * pl.reciprocal(denom, approx=True)                # (bb, Q, P)

    # attended features = attn @ hs  -> (bb, Q, H)
    attended = jnp.einsum("bqp,bph->bqh", attn, hs,
                          preferred_element_type=jnp.float32)

    # Fused class + bbox-layer-1 matmul with M = bb*Q (Q=8 keeps the reshape a
    # pure sublane merge, no relayout).
    att2d = attended.reshape(bb * Q, H)                         # (bb*Q, H)
    fused = jnp.dot(att2d, wf_ref[...],
                    preferred_element_type=jnp.float32) + bf_ref[...]
    h1 = jnp.maximum(fused[:, :H], 0.0)                         # bbox hidden
    cls = fused[:, H:]                                          # (bb*Q, C1)

    box = jnp.dot(h1, w2_ref[...],
                  preferred_element_type=jnp.float32) + b2_ref[...]
    box = jax.nn.sigmoid(box)                                   # (bb*Q, 4)

    # Pack everything into one lane-dense slab: [cls | box | attn | zeros]
    attn2d = attn.reshape(bb * Q, P)
    parts = [cls, box, attn2d]
    pad = out_pad - (C1 + 4 + P)
    if pad > 0:
        parts.append(jnp.zeros((bb * Q, pad), jnp.float32))
    slab = jnp.concatenate(parts, axis=-1)                      # (bb*Q, OUT_PAD)
    out_ref[...] = slab.reshape(bb, Q, out_pad).astype(out_ref.dtype)


def _pick_block_b(B, max_block=8):
    """Largest divisor of B that is <= max_block.

    max_block keeps the per-step VMEM footprint bounded (relevant for v7x's
    64 MiB VMEM / 32 MiB scoped default at ViT-scale P,H) while still leaving
    several grid steps per core for pipelining when B is large.
    """
    bb = min(B, max_block)
    while B % bb:
        bb -= 1
    return bb


def percentage_based_detection_head(hidden_states, params, *, max_block_b=8):
    """hidden_states: [B, P, H] float32. Returns (class_logits, box_coords, attn_weights)."""
    B, P, H = hidden_states.shape
    query_embed = params["query_embed"]              # (Q, H)
    Q = query_embed.shape[0]

    # nn.Linear stores (out, in); transpose to (in, out) for right-multiplication.
    wc = params["class_w"].T                         # (H, C1)
    bc = params["class_b"][None, :]                  # (1, C1)
    w1 = params["bbox_w1"].T                         # (H, H)
    b1 = params["bbox_b1"][None, :]                  # (1, H)
    w2 = params["bbox_w2"].T                         # (H, 4)
    b2 = params["bbox_b2"][None, :]                  # (1, 4)
    C1 = wc.shape[1]

    # Fuse bbox layer-1 and the class head into a single matmul. Layer-1 comes
    # first so its in-kernel slice starts at lane offset 0.
    wf = jnp.concatenate([w1, wc], axis=1)           # (H, H + C1)
    bf = jnp.concatenate([b1, bc], axis=1)           # (1, H + C1)

    # Lane-dense packed output: last dim padded up to a multiple of 128.
    out_pad = ((C1 + 4 + P + 127) // 128) * 128

    block_b = _pick_block_b(B, max_block_b)
    grid = (B // block_b,)

    def replicated(shape):
        # full array, same block every grid step (Pallas skips the re-copy)
        return pl.BlockSpec(shape, lambda b: (0,) * len(shape))

    slab = pl.pallas_call(
        _detection_head_kernel,
        out_shape=jax.ShapeDtypeStruct((B, Q, out_pad), jnp.float32),
        grid_spec=pltpu.PrefetchScalarGridSpec(
            num_scalar_prefetch=0,
            grid=grid,
            in_specs=[
                pl.BlockSpec((block_b, P, H), lambda b: (b, 0, 0)),  # hidden_states
                replicated((Q, H)),                                   # queries
                replicated((H, H + C1)),                              # fused weight
                replicated((1, H + C1)),                              # fused bias
                replicated((H, 4)),                                   # bbox w2
                replicated((1, 4)),                                   # bbox b2
            ],
            out_specs=pl.BlockSpec((block_b, Q, out_pad),
                                   lambda b: (b, 0, 0)),
        ),
        compiler_params=pltpu.CompilerParams(
            dimension_semantics=("parallel",)),
    )(hidden_states, query_embed, wf, bf, w2, b2)

    class_logits = slab[:, :, :C1]
    box_coords = slab[:, :, C1:C1 + 4]
    attn_weights = slab[:, :, C1 + 4:C1 + 4 + P]
    return class_logits, box_coords, attn_weights


def init_params(key, hidden_size, num_classes, num_queries):
    ks = jax.random.split(key, 7)
    scale = 1.0 / jnp.sqrt(hidden_size)
    return {
        # nn.Embedding init ~ N(0,1)
        "query_embed": jax.random.normal(ks[0], (num_queries, hidden_size), jnp.float32),
        # nn.Linear init ~ U(-1/sqrt(in), 1/sqrt(in)); (out, in) layout like PyTorch
        "class_w": jax.random.uniform(ks[1], (num_classes + 1, hidden_size),
                                      jnp.float32, -scale, scale),
        "class_b": jax.random.uniform(ks[2], (num_classes + 1,),
                                      jnp.float32, -scale, scale),
        "bbox_w1": jax.random.uniform(ks[3], (hidden_size, hidden_size),
                                      jnp.float32, -scale, scale),
        "bbox_b1": jax.random.uniform(ks[4], (hidden_size,),
                                      jnp.float32, -scale, scale),
        "bbox_w2": jax.random.uniform(ks[5], (4, hidden_size),
                                      jnp.float32, -scale, scale),
        "bbox_b2": jax.random.uniform(ks[6], (4,),
                                      jnp.float32, -scale, scale),
    }


def reference_forward(hidden_states, params):
    """Pure-JAX reference mirroring the PyTorch forward, for correctness check."""
    B = hidden_states.shape[0]
    queries = jnp.broadcast_to(params["query_embed"][None],
                               (B,) + params["query_embed"].shape)
    attention = jnp.einsum("bqh,bph->bqp", queries, hidden_states)
    attn_w = jax.nn.softmax(attention, axis=-1)
    attended = jnp.einsum("bqp,bph->bqh", attn_w, hidden_states)
    cls = attended @ params["class_w"].T + params["class_b"]
    h1 = jax.nn.relu(attended @ params["bbox_w1"].T + params["bbox_b1"])
    box = jax.nn.sigmoid(h1 @ params["bbox_w2"].T + params["bbox_b2"])
    return cls, box, attn_w


if __name__ == "__main__":
    # Small shapes consistent with the module's forward:
    # hidden_states [batch=2, num_patches=16, hidden=32]
    B, P, H = 2, 16, 32
    num_classes = 4
    num_queries = 8

    key = jax.random.PRNGKey(0)
    k_x, k_p = jax.random.split(key)
    hidden_states = jax.random.normal(k_x, (B, P, H), jnp.float32)
    params = init_params(k_p, H, num_classes, num_queries)

    cls_logits, box_coords, attn_weights = percentage_based_detection_head(
        hidden_states, params)
    jax.block_until_ready((cls_logits, box_coords, attn_weights))

    # sanity check against the pure-JAX reference
    ref_cls, ref_box, ref_attn = reference_forward(hidden_states, params)
    assert cls_logits.shape == (B, num_queries, num_classes + 1)
    assert box_coords.shape == (B, num_queries, 4)
    assert attn_weights.shape == (B, num_queries, P)
    # Tolerance is slightly looser than 1e-4 because the softmax denominator now
    # uses the hardware approximate reciprocal (EUP vrcp), per the perf review.
    assert jnp.allclose(cls_logits, ref_cls, atol=2e-3, rtol=2e-3)
    assert jnp.allclose(box_coords, ref_box, atol=2e-3, rtol=2e-3)
    assert jnp.allclose(attn_weights, ref_attn, atol=2e-3, rtol=2e-3)

    print("KERNEL_OK")
</pallas_src>

<mosaic_0001>
module attributes {stable_mosaic.version = 11 : i64} {
  func.func @_detection_head_kernel(%arg0: i32, %arg1: memref<2x16x32xf32, #tpu.memory_space<vmem>>, %arg2: memref<8x32xf32, #tpu.memory_space<vmem>>, %arg3: memref<32x37xf32, #tpu.memory_space<vmem>>, %arg4: memref<1x37xf32, #tpu.memory_space<vmem>>, %arg5: memref<32x4xf32, #tpu.memory_space<vmem>>, %arg6: memref<1x4xf32, #tpu.memory_space<vmem>>, %arg7: memref<2x8x128xf32, #tpu.memory_space<vmem>>) attributes {dimension_semantics = [#tpu.dimension_semantics<parallel>], iteration_bounds = array<i64: 1>, scalar_prefetch = 0 : i64, scratch_operands = 0 : i64, tpu.core_type = #tpu.core_type<tc>, window_params = [{transform_indices = @transform_0, window_bounds = array<i64: 2, 16, 32>}, {pipeline_mode = #tpu.pipeline_mode<synchronous>, transform_indices = @transform_1, window_bounds = array<i64: 8, 32>}, {pipeline_mode = #tpu.pipeline_mode<synchronous>, transform_indices = @transform_2, window_bounds = array<i64: 32, 37>}, {pipeline_mode = #tpu.pipeline_mode<synchronous>, transform_indices = @transform_3, window_bounds = array<i64: 1, 37>}, {pipeline_mode = #tpu.pipeline_mode<synchronous>, transform_indices = @transform_4, window_bounds = array<i64: 32, 4>}, {pipeline_mode = #tpu.pipeline_mode<synchronous>, transform_indices = @transform_5, window_bounds = array<i64: 1, 4>}, {transform_indices = @transform_6, window_bounds = array<i64: 2, 8, 128>}]} {
    %c0 = arith.constant 0 : index
    %c0_0 = arith.constant 0 : index
    %c0_1 = arith.constant 0 : index
    %0 = vector.load %arg1[%c0, %c0_0, %c0_1] : memref<2x16x32xf32, #tpu.memory_space<vmem>>, vector<2x16x32xf32>
    %c0_2 = arith.constant 0 : index
    %c0_3 = arith.constant 0 : index
    %1 = vector.load %arg2[%c0_2, %c0_3] : memref<8x32xf32, #tpu.memory_space<vmem>>, vector<8x32xf32>
    %2 = vector.shape_cast %1 : vector<8x32xf32> to vector<1x8x32xf32>
    %3 = vector.broadcast %2 : vector<1x8x32xf32> to vector<2x8x32xf32>
    "tpu.trace_start"() <{level = 10 : i32, message = "bqh,bph->bqp"}> : () -> ()
    %cst = arith.constant dense<0.000000e+00> : vector<2x8x16xf32>
    %4 = tpu.matmul %3, %0, %cst {dimension_numbers = #tpu.dot_dimension_numbers<[2], [2], [1], [1], [0, 0, 0, 1, 1, 1], [0], [0]>} : vector<2x8x32xf32>, vector<2x16x32xf32>, vector<2x8x16xf32> -> vector<2x8x16xf32>
    "tpu.trace_stop"() : () -> ()
    %cst_4 = arith.constant dense<0xFF800000> : vector<2x8xf32>
    %5 = vector.multi_reduction <maximumf>, %4, %cst_4 [2] : vector<2x8x16xf32> to vector<2x8xf32>
    %6 = vector.shape_cast %5 : vector<2x8xf32> to vector<2x8x1xf32>
    %7 = vector.broadcast %6 : vector<2x8x1xf32> to vector<2x8x16xf32>
    %8 = arith.subf %4, %7 : vector<2x8x16xf32>
    %9 = math.exp %8 : vector<2x8x16xf32>
    %cst_5 = arith.constant dense<0.000000e+00> : vector<2x8xf32>
    %10 = vector.multi_reduction <add>, %9, %cst_5 [2] : vector<2x8x16xf32> to vector<2x8xf32>
    %11 = vector.shape_cast %10 : vector<2x8xf32> to vector<2x8x1xf32>
    %12 = tpu.reciprocal %11 {approx = true} : vector<2x8x1xf32> -> vector<2x8x1xf32>
    %13 = vector.broadcast %12 : vector<2x8x1xf32> to vector<2x8x16xf32>
    %14 = arith.mulf %9, %13 : vector<2x8x16xf32>
    "tpu.trace_start"() <{level = 10 : i32, message = "bqp,bph->bqh"}> : () -> ()
    %cst_6 = arith.constant dense<0.000000e+00> : vector<2x8x32xf32>
    %15 = tpu.matmul %14, %0, %cst_6 {dimension_numbers = #tpu.dot_dimension_numbers<[2], [1], [1], [2], [0, 0, 0, 1, 1, 2], [0], [0]>} : vector<2x8x16xf32>, vector<2x16x32xf32>, vector<2x8x32xf32> -> vector<2x8x32xf32>
    "tpu.trace_stop"() : () -> ()
    %16 = vector.shape_cast %15 : vector<2x8x32xf32> to vector<16x32xf32>
    %c0_7 = arith.constant 0 : index
    %c0_8 = arith.constant 0 : index
    %17 = vector.load %arg3[%c0_7, %c0_8] : memref<32x37xf32, #tpu.memory_space<vmem>>, vector<32x37xf32>
    %cst_9 = arith.constant dense<0.000000e+00> : vector<16x37xf32>
    %18 = tpu.matmul %16, %17, %cst_9 {dimension_numbers = #tpu.dot_dimension_numbers<[1], [0], [0], [1], [0, 0, 1, 1], [], []>} : vector<16x32xf32>, vector<32x37xf32>, vector<16x37xf32> -> vector<16x37xf32>
    %c0_10 = arith.constant 0 : index
    %c0_11 = arith.constant 0 : index
    %19 = vector.load %arg4[%c0_10, %c0_11] : memref<1x37xf32, #tpu.memory_space<vmem>>, vector<1x37xf32>
    %20 = vector.broadcast %19 : vector<1x37xf32> to vector<16x37xf32>
    %21 = arith.addf %18, %20 : vector<16x37xf32>
    %22 = vector.extract_strided_slice %21 {offsets = [0, 0], sizes = [16, 32], strides = [1, 1]} : vector<16x37xf32> to vector<16x32xf32>
    %cst_12 = arith.constant 0.000000e+00 : f32
    %23 = vector.broadcast %cst_12 : f32 to vector<16x32xf32>
    %24 = arith.maximumf %22, %23 : vector<16x32xf32>
    %25 = vector.extract_strided_slice %21 {offsets = [0, 32], sizes = [16, 5], strides = [1, 1]} : vector<16x37xf32> to vector<16x5xf32>
    %c0_13 = arith.constant 0 : index
    %c0_14 = arith.constant 0 : index
    %26 = vector.load %arg5[%c0_13, %c0_14] : memref<32x4xf32, #tpu.memory_space<vmem>>, vector<32x4xf32>
    %cst_15 = arith.constant dense<0.000000e+00> : vector<16x4xf32>
    %27 = tpu.matmul %24, %26, %cst_15 {dimension_numbers = #tpu.dot_dimension_numbers<[1], [0], [0], [1], [0, 0, 1, 1], [], []>} : vector<16x32xf32>, vector<32x4xf32>, vector<16x4xf32> -> vector<16x4xf32>
    %c0_16 = arith.constant 0 : index
    %c0_17 = arith.constant 0 : index
    %28 = vector.load %arg6[%c0_16, %c0_17] : memref<1x4xf32, #tpu.memory_space<vmem>>, vector<1x4xf32>
    %29 = vector.broadcast %28 : vector<1x4xf32> to vector<16x4xf32>
    %30 = arith.addf %27, %29 : vector<16x4xf32>
    %31 = arith.negf %30 : vector<16x4xf32>
    %32 = math.exp %31 : vector<16x4xf32>
    %cst_18 = arith.constant 1.000000e+00 : f32
    %33 = vector.broadcast %cst_18 : f32 to vector<16x4xf32>
    %34 = arith.addf %33, %32 : vector<16x4xf32>
    %35 = arith.divf %33, %34 : vector<16x4xf32>
    %36 = vector.shape_cast %14 : vector<2x8x16xf32> to vector<16x16xf32>
    %cst_19 = arith.constant 0.000000e+00 : f32
    %37 = vector.broadcast %cst_19 : f32 to vector<16x103xf32>
    %38 = tpu.concatenate %25, %35, %36, %37 in 1 : vector<16x5xf32>, vector<16x4xf32>, vector<16x16xf32>, vector<16x103xf32> -> vector<16x128xf32>
    %39 = vector.shape_cast %38 : vector<16x128xf32> to vector<2x8x128xf32>
    %c0_20 = arith.constant 0 : index
    %c0_21 = arith.constant 0 : index
    %c0_22 = arith.constant 0 : index
    %40 = vector.load %arg7[%c0_20, %c0_21, %c0_22] : memref<2x8x128xf32, #tpu.memory_space<vmem>>, vector<2x8x128xf32>
    tpu.vector_store %arg7[%c0_20, %c0_21, %c0_22], %39 {strides = array<i32>} : memref<2x8x128xf32, #tpu.memory_space<vmem>>, vector<2x8x128xf32>,
    return
  }
  func.func @transform_0(%arg0: i32) -> (i32, i32, i32) {
    %c0_i32 = arith.constant 0 : i32
    %c0_i32_0 = arith.constant 0 : i32
    %c0_i32_1 = arith.constant 0 : i32
    return %arg0, %c0_i32, %c0_i32_0 : i32, i32, i32
  }
  func.func @transform_1(%arg0: i32) -> (i32, i32) {
    %c0_i32 = arith.constant 0 : i32
    %c0_i32_0 = arith.constant 0 : i32
    %c0_i32_1 = arith.constant 0 : i32
    return %c0_i32, %c0_i32_0 : i32, i32
  }
  func.func @transform_2(%arg0: i32) -> (i32, i32) {
    %c0_i32 = arith.constant 0 : i32
    %c0_i32_0 = arith.constant 0 : i32
    %c0_i32_1 = arith.constant 0 : i32
    return %c0_i32, %c0_i32_0 : i32, i32
  }
  func.func @transform_3(%arg0: i32) -> (i32, i32) {
    %c0_i32 = arith.constant 0 : i32
    %c0_i32_0 = arith.constant 0 : i32
    %c0_i32_1 = arith.constant 0 : i32
    return %c0_i32, %c0_i32_0 : i32, i32
  }
  func.func @transform_4(%arg0: i32) -> (i32, i32) {
    %c0_i32 = arith.constant 0 : i32
    %c0_i32_0 = arith.constant 0 : i32
    %c0_i32_1 = arith.constant 0 : i32
    return %c0_i32, %c0_i32_0 : i32, i32
  }
  func.func @transform_5(%arg0: i32) -> (i32, i32) {
    %c0_i32 = arith.constant 0 : i32
    %c0_i32_0 = arith.constant 0 : i32
    %c0_i32_1 = arith.constant 0 : i32
    return %c0_i32, %c0_i32_0 : i32, i32
  }
  func.func @transform_6(%arg0: i32) -> (i32, i32, i32) {
    %c0_i32 = arith.constant 0 : i32
    %c0_i32_0 = arith.constant 0 : i32
    %c0_i32_1 = arith.constant 0 : i32
    return %arg0, %c0_i32, %c0_i32_0 : i32, i32, i32
  }
}

</mosaic_0001>

<llo_original>
// kernel: tpu_custom_call.1
$region0: #{tpu_custom_call.1}
  #allocation0 [shape = 'u32[]', space=smem, size = 0x4, offset = 0x4, fixed_abs, tag = 'smem constant byte address 0x4 - core index']
  #allocation1 [shape = 'u32[144,128]{1,0:T(1,128)}', space=vmem, size = 0x12000, scoped, tag = 'internal scratch']
  %s0 = inlined_call_operand.vmem [shape: f32[2,16,32], index: 0, kind: input, shape index: {}]
  %s1 = inlined_call_operand.hbm [shape: f32[8,32], index: 1, kind: input, shape index: {}]
  %s2 = inlined_call_operand.hbm [shape: f32[32,37], index: 2, kind: input, shape index: {}]
  %s3 = inlined_call_operand.vmem [shape: f32[1,37], index: 3, kind: input, shape index: {}]
  %s4 = inlined_call_operand.vmem [shape: f32[32,4], index: 4, kind: input, shape index: {}]
  %s5 = inlined_call_operand.vmem [shape: f32[1,4], index: 5, kind: input, shape index: {}]
  %s6 = inlined_call_operand.hbm [shape: f32[2,8,128], index: 6, kind: output, shape index: {}]
  %s7 = sld [smem:[#allocation0]]
  $region42: #{tpu_custom_call.1} parent=0
    _
  %s9 = ssub.s32 1, %s7
  %s10 = scalar_select 0, %s9, %s7
  $region1: #{tpu_custom_call.1} parent=0
    #allocation2 [shape = 'u8[4096]{0}', space=vmem, size = 0x1000, scoped, tag = 'input window, operand 1, single buffered']
    #allocation3 [shape = 's32[1]{0}', space=sflag, size = 0x4, scoped, tag = 'scoped memory for tpu_custom_call.1']
    #allocation4 [shape = 's32[1]{0}', space=sflag, size = 0x4, scoped, tag = 'scoped memory for tpu_custom_call.1']
    #allocation5 [shape = 'u8[16384]{0}', space=vmem, size = 0x4000, scoped, tag = 'input window, operand 2, single buffered']
    #allocation6 [shape = 's32[1]{0}', space=sflag, size = 0x4, scoped, tag = 'scoped memory for tpu_custom_call.1']
    #allocation7 [shape = 'u8[8192]{0}', space=vmem, size = 0x2000, scoped, tag = 'output window, operand 0, single buffered']
    %11 = vsyncpa [#allocation3], 0
    %12 = vsyncpa [#allocation6], 0
    %13 = vsyncpa [#allocation4], 0
    // Predicated region
    $region2: #{tpu_custom_call.1} parent=1 // pred_check
      _
    $region3: #{tpu_custom_call.1} parent=1 // pred_check_branch
      %15 = sbr.rel (0) target = $region5
    $region4: #{tpu_custom_call.1} parent=1 // pred_region
      _
    $region5: #{tpu_custom_call.1} parent=1 // pred_fallthru
      _
    // Predicated region
    $region6: #{tpu_custom_call.1} parent=1 // pred_check
      _
    $region7: #{tpu_custom_call.1} parent=1 // pred_check_branch
      %17 = sbr.rel (0) target = $region9
    $region8: #{tpu_custom_call.1} parent=1 // pred_region
      %s19 = ssub.s32 128, 128
      %20 = vsyncadd [#allocation3], %s19
      %s22 = sshll.u32 [#allocation2], 4
      %s23 = int_to_ptr.vmem [resolvable:$true] %s22
      %25 = dma.hbm_to_vmem [thread:$0]  %s1, 128, %s23, [#allocation3]
    $region9: #{tpu_custom_call.1} parent=1 // pred_fallthru
      _
    // Predicated region
    $region10: #{tpu_custom_call.1} parent=1 // pred_check
      _
    $region11: #{tpu_custom_call.1} parent=1 // pred_check_branch
      %27 = sbr.rel (0) target = $region13
    $region12: #{tpu_custom_call.1} parent=1 // pred_region
      %s29 = ssub.s32 512, 512
      %30 = vsyncadd [#allocation6], %s29
      %s31 = sshll.u32 [#allocation5], 4
      %s32 = int_to_ptr.vmem [resolvable:$true] %s31
      %37 = dma.hbm_to_vmem [thread:$0]  %s2, 512, %s32, [#allocation6], 128, 128, 8
    $region13: #{tpu_custom_call.1} parent=1 // pred_fallthru
      _
    // Predicated region
    $region14: #{tpu_custom_call.1} parent=1 // pred_check
      _
    $region15: #{tpu_custom_call.1} parent=1 // pred_check_branch
      %39 = sbr.rel (0) target = $region17
    $region16: #{tpu_custom_call.1} parent=1 // pred_region
      _
    $region17: #{tpu_custom_call.1} parent=1 // pred_fallthru
      _
    // Predicated region
    $region18: #{tpu_custom_call.1} parent=1 // pred_check
      _
    $region19: #{tpu_custom_call.1} parent=1 // pred_check_branch
      %41 = sbr.rel (0) target = $region21
    $region20: #{tpu_custom_call.1} parent=1 // pred_region
      _
    $region21: #{tpu_custom_call.1} parent=1 // pred_fallthru
      _
    // Predicated region
    $region22: #{tpu_custom_call.1} parent=1 // pred_check
      _
    $region23: #{tpu_custom_call.1} parent=1 // pred_check_branch
      %43 = sbr.rel (0) target = $region25
    $region24: #{tpu_custom_call.1} parent=1 // pred_region
      _
    $region25: #{tpu_custom_call.1} parent=1 // pred_fallthru
      _
    // Predicated region
    $region26: #{tpu_custom_call.1} parent=1 // pred_check
      _
    $region27: #{tpu_custom_call.1} parent=1 // pred_check_branch
      %45 = sbr.rel (0) target = $region29
    $region28: #{tpu_custom_call.1} parent=1 // pred_region
      %46 = dma.done [#allocation3], 128
    $region29: #{tpu_custom_call.1} parent=1 // pred_fallthru
      _
    // Predicated region
    $region30: #{tpu_custom_call.1} parent=1 // pred_check
      _
    $region31: #{tpu_custom_call.1} parent=1 // pred_check_branch
      %48 = sbr.rel (0) target = $region33
    $region32: #{tpu_custom_call.1} parent=1 // pred_region
      %49 = dma.done [#allocation6], 512
    $region33: #{tpu_custom_call.1} parent=1 // pred_fallthru
      _
    %v50 = vld [vmem:[%s0] sm:$0xff]
    %v51 = vld [vmem:[%s0 + $0x8] sm:$0xff]
    %v52 = vld [vmem:[%s0 + $0x10] sm:$0xff]
    %v53 = vld [vmem:[%s0 + $0x18] sm:$0xff]
    %v54 = vld [vmem:[#allocation2] sm:$0xff]
    %vm55 = vcmask 261120
    %v57 = vsel %vm55, %v54, 0
    %v60 = vsel %vm55, %v50, 0
    %v63 = vsel %vm55, %v51, 0
    %65 = vmatprep.subr.mxu0 0.0
    %66 = vmatpush1.xpose.msra.mxu0 0.0
    %67 = vmatprep.subr.mxu0 0.0
    %68 = vmatpush1.xpose.msra.mxu0 0.0
    %69 = vmatprep.subr.mxu0 0.0
    %70 = vmatpush1.xpose.msra.mxu0 0.0
    %71 = vmatprep.subr.mxu0 0.0
    %72 = vmatpush1.xpose.msra.mxu0 0.0
    %73 = vmatprep.subr.mxu0 0.0
    %74 = vmatpush1.xpose.msra.mxu0 0.0
    %75 = vmatprep.subr.mxu0 0.0
    %76 = vmatpush1.xpose.msra.mxu0 0.0
    %77 = vmatprep.subr.mxu0 0.0
    %78 = vmatpush1.xpose.msra.mxu0 0.0
    %79 = vmatprep.subr.mxu0 0.0
    %80 = vmatpush1.xpose.msra.mxu0 0.0
    %81 = vmatprep.subr.mxu0 0.0
    %82 = vmatpush1.xpose.msra.mxu0 0.0
    %83 = vmatprep.subr.mxu0 0.0
    %84 = vmatpush1.xpose.msra.mxu0 0.0
    %85 = vmatprep.subr.mxu0 0.0
    %86 = vmatpush1.xpose.msra.mxu0 0.0
    %87 = vmatprep.subr.mxu0 0.0
    %88 = vmatpush1.xpose.msra.mxu0 0.0
    %89 = vmatprep.subr.mxu0 0.0
    %90 = vmatpush1.xpose.msra.mxu0 0.0
    %91 = vmatprep.subr.mxu0 0.0
    %92 = vmatpush1.xpose.msra.mxu0 0.0
    %93 = vmatprep.subr.mxu0 0.0
    %94 = vmatpush1.xpose.msra.mxu0 %v63
    %95 = vmatprep.subr.mxu0 0.0
    %96 = vmatpush1.xpose.msra.mxu0 %v60
    %97 = vmatprep.subr.mxu0 0.0
    %98 = vmatpush2.xpose.msra.mxu0 0.0
    %99 = vmatprep.subr.mxu0 0.0
    %100 = vmatpush2.xpose.msra.mxu0 0.0
    %101 = vmatprep.subr.mxu0 0.0
    %102 = vmatpush2.xpose.msra.mxu0 0.0
    %103 = vmatprep.subr.mxu0 0.0
    %104 = vmatpush2.xpose.msra.mxu0 0.0
    %105 = vmatprep.subr.mxu0 0.0
    %106 = vmatpush2.xpose.msra.mxu0 0.0
    %107 = vmatprep.subr.mxu0 0.0
    %108 = vmatpush2.xpose.msra.mxu0 0.0
    %109 = vmatprep.subr.mxu0 0.0
    %110 = vmatpush2.xpose.msra.mxu0 0.0
    %111 = vmatprep.subr.mxu0 0.0
    %112 = vmatpush2.xpose.msra.mxu0 0.0
    %113 = vmatprep.subr.mxu0 0.0
    %114 = vmatpush2.xpose.msra.mxu0 0.0
    %115 = vmatprep.subr.mxu0 0.0
    %116 = vmatpush2.xpose.msra.mxu0 0.0
    %117 = vmatprep.subr.mxu0 0.0
    %118 = vmatpush2.xpose.msra.mxu0 0.0
    %119 = vmatprep.subr.mxu0 0.0
    %120 = vmatpush2.xpose.msra.mxu0 0.0
    %121 = vmatprep.subr.mxu0 0.0
    %122 = vmatpush2.xpose.msra.mxu0 0.0
    %123 = vmatprep.subr.mxu0 0.0
    %124 = vmatpush2.xpose.msra.mxu0 0.0
    %125 = vmatprep.subr.mxu0 0.0
    %126 = vmatpush2.xpose.msra.mxu0 0.0
    %127 = vmatprep.subr.mxu0 0.0
    %128 = vmatpush2.xpose.msra.mxu0 0.0
    %129 = vmatprep.mubr.f32.mxu0 0.0
    %130 = vmatmul.mubr.f32.gmra.mxu0 %v57
    %v131 = vpop.f32.mrf.mxu0
    %v132 = vadd.f32 0.0, %v131
    %v133 = vpop.f32.mrf.mxu0
    %134 = vdwg.mxu0
    %v136 = vsel %vm55, %v52, 0
    %v139 = vsel %vm55, %v53, 0
    %141 = vmatprep.subr.mxu0 0.0
    %142 = vmatpush1.xpose.msra.mxu0 0.0
    %143 = vmatprep.subr.mxu0 0.0
    %144 = vmatpush1.xpose.msra.mxu0 0.0
    %145 = vmatprep.subr.mxu0 0.0
    %146 = vmatpush1.xpose.msra.mxu0 0.0
    %147 = vmatprep.subr.mxu0 0.0
    %148 = vmatpush1.xpose.msra.mxu0 0.0
    %149 = vmatprep.subr.mxu0 0.0
    %150 = vmatpush1.xpose.msra.mxu0 0.0
    %151 = vmatprep.subr.mxu0 0.0
    %152 = vmatpush1.xpose.msra.mxu0 0.0
    %153 = vmatprep.subr.mxu0 0.0
    %154 = vmatpush1.xpose.msra.mxu0 0.0
    %155 = vmatprep.subr.mxu0 0.0
    %156 = vmatpush1.xpose.msra.mxu0 0.0
    %157 = vmatprep.subr.mxu0 0.0
    %158 = vmatpush1.xpose.msra.mxu0 0.0
    %159 = vmatprep.subr.mxu0 0.0
    %160 = vmatpush1.xpose.msra.mxu0 0.0
    %161 = vmatprep.subr.mxu0 0.0
    %162 = vmatpush1.xpose.msra.mxu0 0.0
    %163 = vmatprep.subr.mxu0 0.0
    %164 = vmatpush1.xpose.msra.mxu0 0.0
    %165 = vmatprep.subr.mxu0 0.0
    %166 = vmatpush1.xpose.msra.mxu0 0.0
    %167 = vmatprep.subr.mxu0 0.0
    %168 = vmatpush1.xpose.msra.mxu0 0.0
    %169 = vmatprep.subr.mxu0 0.0
    %170 = vmatpush1.xpose.msra.mxu0 %v139
    %171 = vmatprep.subr.mxu0 0.0
    %172 = vmatpush1.xpose.msra.mxu0 %v136
    %173 = vmatprep.subr.mxu0 0.0
    %174 = vmatpush2.xpose.msra.mxu0 0.0
    %175 = vmatprep.subr.mxu0 0.0
    %176 = vmatpush2.xpose.msra.mxu0 0.0
    %177 = vmatprep.subr.mxu0 0.0
    %178 = vmatpush2.xpose.msra.mxu0 0.0
    %179 = vmatprep.subr.mxu0 0.0
    %180 = vmatpush2.xpose.msra.mxu0 0.0
    %181 = vmatprep.subr.mxu0 0.0
    %182 = vmatpush2.xpose.msra.mxu0 0.0
    %183 = vmatprep.subr.mxu0 0.0
    %184 = vmatpush2.xpose.msra.mxu0 0.0
    %185 = vmatprep.subr.mxu0 0.0
    %186 = vmatpush2.xpose.msra.mxu0 0.0
    %187 = vmatprep.subr.mxu0 0.0
    %188 = vmatpush2.xpose.msra.mxu0 0.0
    %189 = vmatprep.subr.mxu0 0.0
    %190 = vmatpush2.xpose.msra.mxu0 0.0
    %191 = vmatprep.subr.mxu0 0.0
    %192 = vmatpush2.xpose.msra.mxu0 0.0
    %193 = vmatprep.subr.mxu0 0.0
    %194 = vmatpush2.xpose.msra.mxu0 0.0
    %195 = vmatprep.subr.mxu0 0.0
    %196 = vmatpush2.xpose.msra.mxu0 0.0
    %197 = vmatprep.subr.mxu0 0.0
    %198 = vmatpush2.xpose.msra.mxu0 0.0
    %199 = vmatprep.subr.mxu0 0.0
    %200 = vmatpush2.xpose.msra.mxu0 0.0
    %201 = vmatprep.subr.mxu0 0.0
    %202 = vmatpush2.xpose.msra.mxu0 0.0
    %203 = vmatprep.subr.mxu0 0.0
    %204 = vmatpush2.xpose.msra.mxu0 0.0
    %205 = vmatprep.mubr.f32.mxu0 0.0
    %206 = vmatmul.mubr.f32.gmra.mxu0 %v57
    %v207 = vpop.f32.mrf.mxu0
    %v208 = vadd.f32 0.0, %v207
    %v209 = vpop.f32.mrf.mxu0
    %210 = vdwg.mxu0
    %vm211 = vcmask 130048
    %v212 = vsel %vm211, %v132, -inf
    %213 = vmax.xlane.f32.xlu0 %v212
    %v214 = vpop.xlane.xlu0 %213
    %v215 = vsel %vm211, %v208, -inf
    %216 = vmax.xlane.f32.xlu0 %v215
    %v217 = vpop.xlane.xlu0 %216
    %v218 = vsub.f32 %v132, %v214
    %v219 = vsub.f32 %v208, %v217
    %v220 = vmul.f32 %v218, 1.442695
    %v221 = vpow.pop %v220
    %v222 = vmul.f32 %v219, 1.442695
    %v223 = vpow.pop %v222
    %v224 = vsel %vm211, %v221, 0.0
    %225 = vadd.xlane.f32.xlu0 %v224
    %v226 = vpop.xlane.xlu0 %225
    %v227 = vsel %vm211, %v223, 0.0
    %228 = vadd.xlane.f32.xlu0 %v227
    %v229 = vpop.xlane.xlu0 %228
    %v230 = vrcp.pop %v226
    %v231 = vrcp.pop %v229
    %v232 = vmul.f32 %v221, %v230
    %v233 = vmul.f32 %v223, %v231
    %v235 = vsel %vm211, %v232, 0
    %237 = vmatprep.subr.mxu0 0.0
    %238 = vmatpush1.msra.mxu0 0.0
    %239 = vmatprep.subr.mxu0 0.0
    %240 = vmatpush1.msra.mxu0 0.0
    %241 = vmatprep.subr.mxu0 0.0
    %242 = vmatpush1.msra.mxu0 0.0
    %243 = vmatprep.subr.mxu0 0.0
    %244 = vmatpush1.msra.mxu0 0.0
    %245 = vmatprep.subr.mxu0 0.0
    %246 = vmatpush1.msra.mxu0 0.0
    %247 = vmatprep.subr.mxu0 0.0
    %248 = vmatpush1.msra.mxu0 0.0
    %249 = vmatprep.subr.mxu0 0.0
    %250 = vmatpush1.msra.mxu0 0.0
    %251 = vmatprep.subr.mxu0 0.0
    %252 = vmatpush1.msra.mxu0 0.0
    %253 = vmatprep.subr.mxu0 0.0
    %254 = vmatpush1.msra.mxu0 0.0
    %255 = vmatprep.subr.mxu0 0.0
    %256 = vmatpush1.msra.mxu0 0.0
    %257 = vmatprep.subr.mxu0 0.0
    %258 = vmatpush1.msra.mxu0 0.0
    %259 = vmatprep.subr.mxu0 0.0
    %260 = vmatpush1.msra.mxu0 0.0
    %261 = vmatprep.subr.mxu0 0.0
    %262 = vmatpush1.msra.mxu0 0.0
    %263 = vmatprep.subr.mxu0 0.0
    %264 = vmatpush1.msra.mxu0 0.0
    %265 = vmatprep.subr.mxu0 0.0
    %266 = vmatpush1.msra.mxu0 %v51
    %267 = vmatprep.subr.mxu0 0.0
    %268 = vmatpush1.msra.mxu0 %v50
    %269 = vmatprep.subr.mxu0 0.0
    %270 = vmatpush2.msra.mxu0 0.0
    %271 = vmatprep.subr.mxu0 0.0
    %272 = vmatpush2.msra.mxu0 0.0
    %273 = vmatprep.subr.mxu0 0.0
    %274 = vmatpush2.msra.mxu0 0.0
    %275 = vmatprep.subr.mxu0 0.0
    %276 = vmatpush2.msra.mxu0 0.0
    %277 = vmatprep.subr.mxu0 0.0
    %278 = vmatpush2.msra.mxu0 0.0
    %279 = vmatprep.subr.mxu0 0.0
    %280 = vmatpush2.msra.mxu0 0.0
    %281 = vmatprep.subr.mxu0 0.0
    %282 = vmatpush2.msra.mxu0 0.0
    %283 = vmatprep.subr.mxu0 0.0
    %284 = vmatpush2.msra.mxu0 0.0
    %285 = vmatprep.subr.mxu0 0.0
    %286 = vmatpush2.msra.mxu0 0.0
    %287 = vmatprep.subr.mxu0 0.0
    %288 = vmatpush2.msra.mxu0 0.0
    %289 = vmatprep.subr.mxu0 0.0
    %290 = vmatpush2.msra.mxu0 0.0
    %291 = vmatprep.subr.mxu0 0.0
    %292 = vmatpush2.msra.mxu0 0.0
    %293 = vmatprep.subr.mxu0 0.0
    %294 = vmatpush2.msra.mxu0 0.0
    %295 = vmatprep.subr.mxu0 0.0
    %296 = vmatpush2.msra.mxu0 0.0
    %297 = vmatprep.subr.mxu0 0.0
    %298 = vmatpush2.msra.mxu0 0.0
    %299 = vmatprep.subr.mxu0 0.0
    %300 = vmatpush2.msra.mxu0 0.0
    %301 = vmatprep.mubr.f32.mxu0 0.0
    %302 = vmatmul.mubr.f32.gmra.mxu0 %v235
    %v303 = vpop.f32.mrf.mxu0
    %v304 = vadd.f32 0.0, %v303
    %v305 = vpop.f32.mrf.mxu0
    %306 = vdwg.mxu0
    %v308 = vsel %vm211, %v233, 0
    %310 = vmatprep.subr.mxu0 0.0
    %311 = vmatpush1.msra.mxu0 0.0
    %312 = vmatprep.subr.mxu0 0.0
    %313 = vmatpush1.msra.mxu0 0.0
    %314 = vmatprep.subr.mxu0 0.0
    %315 = vmatpush1.msra.mxu0 0.0
    %316 = vmatprep.subr.mxu0 0.0
    %317 = vmatpush1.msra.mxu0 0.0
    %318 = vmatprep.subr.mxu0 0.0
    %319 = vmatpush1.msra.mxu0 0.0
    %320 = vmatprep.subr.mxu0 0.0
    %321 = vmatpush1.msra.mxu0 0.0
    %322 = vmatprep.subr.mxu0 0.0
    %323 = vmatpush1.msra.mxu0 0.0
    %324 = vmatprep.subr.mxu0 0.0
    %325 = vmatpush1.msra.mxu0 0.0
    %326 = vmatprep.subr.mxu0 0.0
    %327 = vmatpush1.msra.mxu0 0.0
    %328 = vmatprep.subr.mxu0 0.0
    %329 = vmatpush1.msra.mxu0 0.0
    %330 = vmatprep.subr.mxu0 0.0
    %331 = vmatpush1.msra.mxu0 0.0
    %332 = vmatprep.subr.mxu0 0.0
    %333 = vmatpush1.msra.mxu0 0.0
    %334 = vmatprep.subr.mxu0 0.0
    %335 = vmatpush1.msra.mxu0 0.0
    %336 = vmatprep.subr.mxu0 0.0
    %337 = vmatpush1.msra.mxu0 0.0
    %338 = vmatprep.subr.mxu0 0.0
    %339 = vmatpush1.msra.mxu0 %v53
    %340 = vmatprep.subr.mxu0 0.0
    %341 = vmatpush1.msra.mxu0 %v52
    %342 = vmatprep.subr.mxu0 0.0
    %343 = vmatpush2.msra.mxu0 0.0
    %344 = vmatprep.subr.mxu0 0.0
    %345 = vmatpush2.msra.mxu0 0.0
    %346 = vmatprep.subr.mxu0 0.0
    %347 = vmatpush2.msra.mxu0 0.0
    %348 = vmatprep.subr.mxu0 0.0
    %349 = vmatpush2.msra.mxu0 0.0
    %350 = vmatprep.subr.mxu0 0.0
    %351 = vmatpush2.msra.mxu0 0.0
    %352 = vmatprep.subr.mxu0 0.0
    %353 = vmatpush2.msra.mxu0 0.0
    %354 = vmatprep.subr.mxu0 0.0
    %355 = vmatpush2.msra.mxu0 0.0
    %356 = vmatprep.subr.mxu0 0.0
    %357 = vmatpush2.msra.mxu0 0.0
    %358 = vmatprep.subr.mxu0 0.0
    %359 = vmatpush2.msra.mxu0 0.0
    %360 = vmatprep.subr.mxu0 0.0
    %361 = vmatpush2.msra.mxu0 0.0
    %362 = vmatprep.subr.mxu0 0.0
    %363 = vmatpush2.msra.mxu0 0.0
    %364 = vmatprep.subr.mxu0 0.0
    %365 = vmatpush2.msra.mxu0 0.0
    %366 = vmatprep.subr.mxu0 0.0
    %367 = vmatpush2.msra.mxu0 0.0
    %368 = vmatprep.subr.mxu0 0.0
    %369 = vmatpush2.msra.mxu0 0.0
    %370 = vmatprep.subr.mxu0 0.0
    %371 = vmatpush2.msra.mxu0 0.0
    %372 = vmatprep.subr.mxu0 0.0
    %373 = vmatpush2.msra.mxu0 0.0
    %374 = vmatprep.mubr.f32.mxu0 0.0
    %375 = vmatmul.mubr.f32.gmra.mxu0 %v308
    %v376 = vpop.f32.mrf.mxu0
    %v377 = vadd.f32 0.0, %v376
    %v378 = vpop.f32.mrf.mxu0
    %379 = vdwg.mxu0
    %v380 = vld [vmem:[#allocation5] sm:$0xff]
    %v381 = vld [vmem:[#allocation5 + $0x8] sm:$0xff]
    %v382 = vld [vmem:[#allocation5 + $0x10] sm:$0xff]
    %v383 = vld [vmem:[#allocation5 + $0x18] sm:$0xff]
    %v384 = vld [vmem:[%s3] sm:$0x1]
    %v386 = vlaneseq
    %v387 = vshrl.u32 %v386, 7
    %v388 = vsub.s32 0, %v387
    %v389 = vrot.slane %v384, %v388
    %v392 = vsel %vm55, %v304, 0
    %v395 = vsel %vm55, %v377, 0
    %397 = vmatprep.subr.mxu0 0.0
    %398 = vmatpush1.msra.mxu0 0.0
    %399 = vmatprep.subr.mxu0 0.0
    %400 = vmatpush1.msra.mxu0 0.0
    %401 = vmatprep.subr.mxu0 0.0
    %402 = vmatpush1.msra.mxu0 0.0
    %403 = vmatprep.subr.mxu0 0.0
    %404 = vmatpush1.msra.mxu0 0.0
    %405 = vmatprep.subr.mxu0 0.0
    %406 = vmatpush1.msra.mxu0 0.0
    %407 = vmatprep.subr.mxu0 0.0
    %408 = vmatpush1.msra.mxu0 0.0
    %409 = vmatprep.subr.mxu0 0.0
    %410 = vmatpush1.msra.mxu0 0.0
    %411 = vmatprep.subr.mxu0 0.0
    %412 = vmatpush1.msra.mxu0 0.0
    %413 = vmatprep.subr.mxu0 0.0
    %414 = vmatpush1.msra.mxu0 0.0
    %415 = vmatprep.subr.mxu0 0.0
    %416 = vmatpush1.msra.mxu0 0.0
    %417 = vmatprep.subr.mxu0 0.0
    %418 = vmatpush1.msra.mxu0 0.0
    %419 = vmatprep.subr.mxu0 0.0
    %420 = vmatpush1.msra.mxu0 0.0
    %421 = vmatprep.subr.mxu0 0.0
    %422 = vmatpush1.msra.mxu0 %v383
    %423 = vmatprep.subr.mxu0 0.0
    %424 = vmatpush1.msra.mxu0 %v382
    %425 = vmatprep.subr.mxu0 0.0
    %426 = vmatpush1.msra.mxu0 %v381
    %427 = vmatprep.subr.mxu0 0.0
    %428 = vmatpush1.msra.mxu0 %v380
    %429 = vmatprep.subr.mxu0 0.0
    %430 = vmatpush2.msra.mxu0 0.0
    %431 = vmatprep.subr.mxu0 0.0
    %432 = vmatpush2.msra.mxu0 0.0
    %433 = vmatprep.subr.mxu0 0.0
    %434 = vmatpush2.msra.mxu0 0.0
    %435 = vmatprep.subr.mxu0 0.0
    %436 = vmatpush2.msra.mxu0 0.0
    %437 = vmatprep.subr.mxu0 0.0
    %438 = vmatpush2.msra.mxu0 0.0
    %439 = vmatprep.subr.mxu0 0.0
    %440 = vmatpush2.msra.mxu0 0.0
    %441 = vmatprep.subr.mxu0 0.0
    %442 = vmatpush2.msra.mxu0 0.0
    %443 = vmatprep.subr.mxu0 0.0
    %444 = vmatpush2.msra.mxu0 0.0
    %445 = vmatprep.subr.mxu0 0.0
    %446 = vmatpush2.msra.mxu0 0.0
    %447 = vmatprep.subr.mxu0 0.0
    %448 = vmatpush2.msra.mxu0 0.0
    %449 = vmatprep.subr.mxu0 0.0
    %450 = vmatpush2.msra.mxu0 0.0
    %451 = vmatprep.subr.mxu0 0.0
    %452 = vmatpush2.msra.mxu0 0.0
    %453 = vmatprep.subr.mxu0 0.0
    %454 = vmatpush2.msra.mxu0 0.0
    %455 = vmatprep.subr.mxu0 0.0
    %456 = vmatpush2.msra.mxu0 0.0
    %457 = vmatprep.subr.mxu0 0.0
    %458 = vmatpush2.msra.mxu0 0.0
    %459 = vmatprep.subr.mxu0 0.0
    %460 = vmatpush2.msra.mxu0 0.0
    %461 = vmatprep.mubr.f32.mxu0 0.0
    %462 = vmatmul.mubr.f32.gmra.mxu0 %v392
    %v463 = vpop.f32.mrf.mxu0
    %v464 = vadd.f32 %v389, %v463
    %v465 = vpop.f32.mrf.mxu0
    %466 = vmatprep.mubr.f32.mxu0 0.0
    %467 = vmatmul.mubr.f32.gmra.mxu0 %v395
    %v468 = vpop.f32.mrf.mxu0
    %v469 = vadd.f32 %v389, %v468
    %v470 = vpop.f32.mrf.mxu0
    %471 = vdwg.mxu0
    %v472 = vmax.f32 %v464, 0.0
    %v473 = vmax.f32 %v469, 0.0
    %v474 = vld [vmem:[%s4] sm:$0xff]
    %v475 = vld [vmem:[%s4 + $0x8] sm:$0xff]
    %v476 = vld [vmem:[%s4 + $0x10] sm:$0xff]
    %v477 = vld [vmem:[%s4 + $0x18] sm:$0xff]
    %v478 = vld [vmem:[%s5] sm:$0x1]
    %v480 = vlaneseq
    %v481 = vshrl.u32 %v480, 7
    %v482 = vsub.s32 0, %v481
    %v483 = vrot.slane %v478, %v482
    %v486 = vsel %vm55, %v472, 0
    %v489 = vsel %vm55, %v473, 0
    %491 = vmatprep.subr.mxu0 0.0
    %492 = vmatpush1.msra.mxu0 0.0
    %493 = vmatprep.subr.mxu0 0.0
    %494 = vmatpush1.msra.mxu0 0.0
    %495 = vmatprep.subr.mxu0 0.0
    %496 = vmatpush1.msra.mxu0 0.0
    %497 = vmatprep.subr.mxu0 0.0
    %498 = vmatpush1.msra.mxu0 0.0
    %499 = vmatprep.subr.mxu0 0.0
    %500 = vmatpush1.msra.mxu0 0.0
    %501 = vmatprep.subr.mxu0 0.0
    %502 = vmatpush1.msra.mxu0 0.0
    %503 = vmatprep.subr.mxu0 0.0
    %504 = vmatpush1.msra.mxu0 0.0
    %505 = vmatprep.subr.mxu0 0.0
    %506 = vmatpush1.msra.mxu0 0.0
    %507 = vmatprep.subr.mxu0 0.0
    %508 = vmatpush1.msra.mxu0 0.0
    %509 = vmatprep.subr.mxu0 0.0
    %510 = vmatpush1.msra.mxu0 0.0
    %511 = vmatprep.subr.mxu0 0.0
    %512 = vmatpush1.msra.mxu0 0.0
    %513 = vmatprep.subr.mxu0 0.0
    %514 = vmatpush1.msra.mxu0 0.0
    %515 = vmatprep.subr.mxu0 0.0
    %516 = vmatpush1.msra.mxu0 %v477
    %517 = vmatprep.subr.mxu0 0.0
    %518 = vmatpush1.msra.mxu0 %v476
    %519 = vmatprep.subr.mxu0 0.0
    %520 = vmatpush1.msra.mxu0 %v475
    %521 = vmatprep.subr.mxu0 0.0
    %522 = vmatpush1.msra.mxu0 %v474
    %523 = vmatprep.subr.mxu0 0.0
    %524 = vmatpush2.msra.mxu0 0.0
    %525 = vmatprep.subr.mxu0 0.0
    %526 = vmatpush2.msra.mxu0 0.0
    %527 = vmatprep.subr.mxu0 0.0
    %528 = vmatpush2.msra.mxu0 0.0
    %529 = vmatprep.subr.mxu0 0.0
    %530 = vmatpush2.msra.mxu0 0.0
    %531 = vmatprep.subr.mxu0 0.0
    %532 = vmatpush2.msra.mxu0 0.0
    %533 = vmatprep.subr.mxu0 0.0
    %534 = vmatpush2.msra.mxu0 0.0
    %535 = vmatprep.subr.mxu0 0.0
    %536 = vmatpush2.msra.mxu0 0.0
    %537 = vmatprep.subr.mxu0 0.0
    %538 = vmatpush2.msra.mxu0 0.0
    %539 = vmatprep.subr.mxu0 0.0
    %540 = vmatpush2.msra.mxu0 0.0
    %541 = vmatprep.subr.mxu0 0.0
    %542 = vmatpush2.msra.mxu0 0.0
    %543 = vmatprep.subr.mxu0 0.0
    %544 = vmatpush2.msra.mxu0 0.0
    %545 = vmatprep.subr.mxu0 0.0
    %546 = vmatpush2.msra.mxu0 0.0
    %547 = vmatprep.subr.mxu0 0.0
    %548 = vmatpush2.msra.mxu0 0.0
    %549 = vmatprep.subr.mxu0 0.0
    %550 = vmatpush2.msra.mxu0 0.0
    %551 = vmatprep.subr.mxu0 0.0
    %552 = vmatpush2.msra.mxu0 0.0
    %553 = vmatprep.subr.mxu0 0.0
    %554 = vmatpush2.msra.mxu0 0.0
    %555 = vmatprep.mubr.f32.mxu0 0.0
    %556 = vmatmul.mubr.f32.gmra.mxu0 %v486
    %v557 = vpop.f32.mrf.mxu0
    %v558 = vadd.f32 %v483, %v557
    %v559 = vpop.f32.mrf.mxu0
    %560 = vmatprep.mubr.f32.mxu0 0.0
    %561 = vmatmul.mubr.f32.gmra.mxu0 %v489
    %v562 = vpop.f32.mrf.mxu0
    %v563 = vadd.f32 %v483, %v562
    %v564 = vpop.f32.mrf.mxu0
    %565 = vdwg.mxu0
    %v566 = vxor.u32 %v558, 2147483648
    %v567 = vxor.u32 %v563, 2147483648
    %v568 = vmul.f32 %v566, 1.442695
    %v569 = vpow.pop %v568
    %v570 = vmul.f32 %v567, 1.442695
    %v571 = vpow.pop %v570
    %v572 = vadd.f32 %v569, 1.0
    %v573 = vadd.f32 %v571, 1.0
    %v574 = vrcp.pop %v572
    %v575 = vmul.f32 1.0, %v574
    %v576 = vrcp.pop %v573
    %v577 = vmul.f32 1.0, %v576
    %580 = vrot.lane.b32.xlu0 %v464, 96
    %v581 = vpop.permute.xlu0 %580
    %582 = vrot.lane.b32.xlu0 %v469, 96
    %v583 = vpop.permute.xlu0 %582
    %588 = vrot.lane.b32.xlu0 %v575, 5
    %v589 = vpop.permute.xlu0 %588
    %590 = vrot.lane.b32.xlu0 %v577, 5
    %v591 = vpop.permute.xlu0 %590
    %594 = vrot.lane.b32.xlu0 %v232, 9
    %v595 = vpop.permute.xlu0 %594
    %596 = vrot.lane.b32.xlu0 %v233, 9
    %v597 = vpop.permute.xlu0 %596
    %vm600 = vcmask 39936
    %v601 = vsel %vm600, %v581, %v589
    %v602 = vsel %vm600, %v583, %v591
    %vm603 = vcmask 72704
    %v604 = vsel %vm603, %v601, %v595
    %v605 = vsel %vm603, %v602, %v597
    %vm606 = vcmask 203776
    %v607 = vsel %vm606, %v604, 0.0
    %v608 = vsel %vm606, %v605, 0.0
    %609 = vst [vmem:[#allocation7] sm:$0xff] %v607
    %610 = vst [vmem:[#allocation7 + $0x8] sm:$0xff] %v608
    // Predicated region
    $region34: #{tpu_custom_call.1} parent=1 // pred_check
      _
    $region35: #{tpu_custom_call.1} parent=1 // pred_check_branch
      %612 = sbr.rel (0) target = $region37
    $region36: #{tpu_custom_call.1} parent=1 // pred_region
      %s614 = ssub.s32 256, 256
      %615 = vsyncadd [#allocation4], %s614
      %s616 = sshll.u32 [#allocation7], 4
      %s617 = int_to_ptr.vmem [resolvable:$true] %s616
      %622 = dma.vmem_to_hbm [thread:$0]  %s617, 256, %s6, [#allocation4], 128, 128, 8
    $region37: #{tpu_custom_call.1} parent=1 // pred_fallthru
      _
    // Predicated region
    $region38: #{tpu_custom_call.1} parent=1 // pred_check
      _
    $region39: #{tpu_custom_call.1} parent=1 // pred_check_branch
      %624 = sbr.rel (0) target = $region41
    $region40: #{tpu_custom_call.1} parent=1 // pred_region
      %625 = dma.done [#allocation4], 256
    $region41: #{tpu_custom_call.1} parent=1 // pred_fallthru
      _
    %626 = vsyncpa [#allocation3], 1
    %627 = vsyncpa [#allocation6], 1
    %628 = vsyncpa [#allocation4], 1

</llo_original>
